<compile_context>
chip_gen: v7x
topology: tpu7x:2x2x1
jax: 0.10.0
libtpu: 0.0.40
codegen_flags: <defaults>
</compile_context>

<pallas_src>
import jax
import jax.numpy as jnp
from jax.experimental import pallas as pl
from jax.experimental.pallas import tpu as pltpu

NEG_BIG = -10000000000.0  # matches torch.tensor(-1e10) used by masked_fill_


def _bahdanau_kernel(hs_ref, e2b_ref, mask_ref, w1t_ref, v_ref, out_ref,
                     m_sc, l_sc, acc_sc):
    """One (batch-tile, seq-chunk) grid step with an online-softmax accumulator.

    hs_ref  : (Sblk, Bblk, H)  chunk of hidden_sequence in its native layout
    e2b_ref : (Bblk, H)        precomputed hidden @ w2.T + b1 + b2   (f32)
    mask_ref: (Sblk, Bblk, 1)  0/1 mask (unit lane dim keeps batch on sublanes)
    w1t_ref : (H, H)           w1.T (activation dtype)
    v_ref   : (1, H)           v    (f32)
    out_ref : (Bblk, H)        context, written on the last seq chunk
    m/l/acc : running max / denominator / weighted-sum accumulators (f32)
    """
    s_idx = pl.program_id(1)
    sblk, bblk, h = hs_ref.shape

    @pl.when(s_idx == 0)
    def _():
        m_sc[...] = jnp.full(m_sc.shape, NEG_BIG, jnp.float32)
        l_sc[...] = jnp.zeros_like(l_sc)
        acc_sc[...] = jnp.zeros_like(acc_sc)

    hs = hs_ref[...]                                          # (Sblk, Bblk, H)

    # e1 = hidden_sequence @ w1.T : one flattened MXU matmul (layout agnostic).
    e1 = jnp.dot(hs.reshape(sblk * bblk, h), w1t_ref[...],
                 preferred_element_type=jnp.float32)          # (Sblk*Bblk, H) f32

    # energy = tanh(e1 + (hidden @ w2.T + b1 + b2))           (EUP tanh)
    energy = jnp.tanh(e1.reshape(sblk, bblk, h) + e2b_ref[...][None, :, :])

    # scores[s, b] = sum_h v[h] * energy[s, b, h]  (lane reduce).  keepdims
    # keeps the batch dim on sublanes so every later broadcast against the
    # (Bblk, 1)/(Bblk, H) accumulators needs no relayout/transpose.
    scores = jnp.sum(v_ref[...][None, :, :] * energy, axis=2, keepdims=True)
    scores = jnp.where(mask_ref[...] > 0.0, scores, NEG_BIG)  # (Sblk, Bblk, 1)

    # Online softmax over the sequence (leading) axis.
    m_old = m_sc[...]                                         # (Bblk, 1)
    m_new = jnp.maximum(m_old, jnp.max(scores, axis=0))       # (Bblk, 1)
    alpha = jnp.exp(m_old - m_new)                            # (Bblk, 1)
    p = jnp.exp(scores - m_new[None, :, :])                   # (Sblk, Bblk, 1)

    l_sc[...] = alpha * l_sc[...] + jnp.sum(p, axis=0)        # (Bblk, 1)
    # Context accumulation on the VPU (mul + leading-dim reduce): the MXU is
    # already saturated by e1, and q=1 batched matmuls are fill/drain bound.
    acc_sc[...] = alpha * acc_sc[...] + jnp.sum(p * hs.astype(jnp.float32), axis=0)
    m_sc[...] = m_new

    @pl.when(s_idx == pl.num_programs(1) - 1)
    def _():
        out_ref[...] = (acc_sc[...] *
                        pl.reciprocal(l_sc[...], approx=False)).astype(out_ref.dtype)


def _pick_tiles(S, B, H, itemsize, budget_bytes):
    """Pick (Sblk, Bblk): largest per-step workload whose VMEM footprint fits."""
    g = 32 // itemsize                     # sublane granularity for batch-tiled blocks

    if B % g != 0:
        b_cands = [B]                      # must use the full (untiled) batch dim
    else:
        cap = B // 2 if B >= 2 * g else B  # n_b >= 2 when possible (v7x: 2 TCs + pipelining)
        cap = max(g, (cap // g) * g)
        b_cands = [b for b in range(cap, 0, -g) if B % b == 0] or [B]

    # Seq-chunk candidates: divisors of S (largest first), capped at 1024.
    s_cands = [d for d in range(min(S, 1024), 0, -1) if S % d == 0]

    def vmem_bytes(sblk, bblk):
        hs_tile = 2 * sblk * bblk * H * itemsize      # double-buffered hs chunk
        temps = 4 * sblk * bblk * H * 4               # e1/energy/p*hs/f32-cast temps
        fixed = (2 * H * H * itemsize                 # w1t (buffered)
                 + 2 * bblk * H * 4                   # e2b
                 + 2 * bblk * H * itemsize            # out block
                 + bblk * H * 4                       # acc scratch
                 + 2 * sblk * bblk * 4                # mask
                 + 8 * H * 4)                         # v + slack
        return hs_tile + temps + fixed

    best = None
    for bblk in b_cands:
        for sblk in s_cands:
            if vmem_bytes(sblk, bblk) <= budget_bytes:
                if best is None or sblk * bblk > best[0] * best[1]:
                    best = (sblk, bblk)
                break                                  # first fit is largest for this bblk
    if best is None:                                   # pathological shapes: smallest tiles
        best = (s_cands[-1], b_cands[-1])
    return best


def bahdanau_attention(hidden, hidden_sequence, input_masks, params):
    """hidden (1,B,H), hidden_sequence (S,B,H), input_masks (S,B) bool -> (1,B,H)."""
    w1, b1, w2, b2, v = params
    S, B, H = hidden_sequence.shape
    dt = hidden_sequence.dtype
    itemsize = jnp.dtype(dt).itemsize
    f32 = jnp.float32

    # --- hoisted / folded prep (all O(B*H^2) or smaller; no HBM pass over hs) ---
    e2b = (hidden.reshape(B, H).astype(f32) @ jnp.transpose(w2).astype(f32)
           + (b1 + b2).astype(f32))                        # (B, H) f32
    w1t = jnp.transpose(w1).astype(dt)                     # x @ w1t == w1(x), bias folded above
    v2 = v.reshape(1, H).astype(f32)
    # f32 mask (not bool/int8) keeps batch-block granularity at 8 sublanes; its
    # DMA traffic is S*B*4 bytes, i.e. ~H/itemsize x smaller than hs itself.
    mask3 = input_masks.astype(f32)[:, :, None]            # (S, B, 1)

    # --- tile sizing from the VMEM budget --------------------------------------
    try:
        vmem_cap = pltpu.get_tpu_info().vmem_capacity_bytes
    except Exception:
        vmem_cap = 64 * 1024 * 1024                        # conservative (v7x)
    budget = int(vmem_cap * 0.75)                          # headroom under physical VMEM
    sblk, bblk = _pick_tiles(S, B, H, itemsize, budget)
    n_b, n_s = B // bblk, S // sblk

    out = pl.pallas_call(
        _bahdanau_kernel,
        out_shape=jax.ShapeDtypeStruct((B, H), dt),
        grid_spec=pltpu.PrefetchScalarGridSpec(
            num_scalar_prefetch=0,
            grid=(n_b, n_s),                               # reduction (seq) axis last
            in_specs=[
                pl.BlockSpec((sblk, bblk, H), lambda b, s: (s, b, 0)),   # hs (native layout)
                pl.BlockSpec((bblk, H), lambda b, s: (b, 0)),            # e2b
                pl.BlockSpec((sblk, bblk, 1), lambda b, s: (s, b, 0)),   # mask
                pl.BlockSpec((H, H), lambda b, s: (0, 0)),               # w1t
                pl.BlockSpec((1, H), lambda b, s: (0, 0)),               # v
            ],
            out_specs=pl.BlockSpec((bblk, H), lambda b, s: (b, 0)),
            scratch_shapes=[
                pltpu.VMEM((bblk, 1), jnp.float32),        # running max
                pltpu.VMEM((bblk, 1), jnp.float32),        # running denominator
                pltpu.VMEM((bblk, H), jnp.float32),        # running weighted sum
            ],
        ),
        compiler_params=pltpu.CompilerParams(
            dimension_semantics=("parallel", "arbitrary"),
            vmem_limit_bytes=budget,
        ),
    )(hidden_sequence, e2b, mask3, w1t, v2)

    return out[None, :, :]                                 # (1, B, H)


def bahdanau_reference(hidden, hidden_sequence, input_masks, params):
    """Pure-JAX replica of the PyTorch forward, for correctness checking."""
    w1, b1, w2, b2, v = params
    hid = jnp.broadcast_to(hidden, hidden_sequence.shape)              # (S,B,H)
    energy = hidden_sequence @ w1.T + b1 + hid @ w2.T + b2             # (S,B,H)
    energy = jnp.sum(v * jnp.tanh(energy), axis=2)                     # (S,B)
    energy = jnp.where(input_masks, energy, NEG_BIG).T                 # (B,S)
    attn = jax.nn.softmax(energy, axis=1)[:, None, :]                  # (B,1,S)
    ctx = jnp.matmul(attn, jnp.transpose(hidden_sequence, (1, 0, 2)))  # (B,1,H)
    return jnp.transpose(ctx, (1, 0, 2))                               # (1,B,H)


if __name__ == "__main__":
    S, B, H = 8, 2, 32

    key = jax.random.PRNGKey(0)
    k_hid, k_seq, k_w1, k_b1, k_w2, k_b2, k_v, k_mask = jax.random.split(key, 8)

    # Deterministic synthetic parameters (shapes follow nn.Linear(H,H) / Parameter(H)).
    bound = 1.0 / (H ** 0.5)
    w1 = jax.random.uniform(k_w1, (H, H), jnp.float32, -bound, bound)
    b1 = jax.random.uniform(k_b1, (H,), jnp.float32, -bound, bound)
    w2 = jax.random.uniform(k_w2, (H, H), jnp.float32, -bound, bound)
    b2 = jax.random.uniform(k_b2, (H,), jnp.float32, -bound, bound)
    v = jax.random.uniform(k_v, (H,), jnp.float32)   # torch.rand(hidden_size)
    params = (w1, b1, w2, b2, v)

    hidden = jax.random.normal(k_hid, (1, B, H), jnp.float32)
    hidden_sequence = jax.random.normal(k_seq, (S, B, H), jnp.float32)
    # Boolean mask with some padded (False) positions; keep at least one True per column.
    input_masks = jax.random.uniform(k_mask, (S, B)) > 0.3
    input_masks = input_masks.at[0, :].set(True)

    out = bahdanau_attention(hidden, hidden_sequence, input_masks, params)
    out = jax.block_until_ready(out)

    ref = bahdanau_reference(hidden, hidden_sequence, input_masks, params)
    assert out.shape == (1, B, H), out.shape
    # Tolerance accounts for the MXU's default (reduced) f32 matmul precision;
    # the softmax reciprocal is exact (approx=False) in this version.
    assert jnp.allclose(out, ref, atol=1e-3, rtol=1e-3), (
        f"max abs err = {jnp.max(jnp.abs(out - ref))}")

    print("KERNEL_OK")
</pallas_src>

<mosaic_0001>
module attributes {stable_mosaic.version = 11 : i64} {
  func.func @_bahdanau_kernel(%arg0: i32, %arg1: i32, %arg2: memref<8x2x32xf32, #tpu.memory_space<vmem>>, %arg3: memref<2x32xf32, #tpu.memory_space<vmem>>, %arg4: memref<8x2x1xf32, #tpu.memory_space<vmem>>, %arg5: memref<32x32xf32, #tpu.memory_space<vmem>>, %arg6: memref<1x32xf32, #tpu.memory_space<vmem>>, %arg7: memref<2x32xf32, #tpu.memory_space<vmem>>, %arg8: memref<2x1xf32, #tpu.memory_space<vmem>>, %arg9: memref<2x1xf32, #tpu.memory_space<vmem>>, %arg10: memref<2x32xf32, #tpu.memory_space<vmem>>) attributes {dimension_semantics = [#tpu.dimension_semantics<parallel>, #tpu.dimension_semantics<arbitrary>], iteration_bounds = array<i64: 1, 1>, scalar_prefetch = 0 : i64, scratch_operands = 3 : i64, tpu.core_type = #tpu.core_type<tc>, window_params = [{transform_indices = @transform_0, window_bounds = array<i64: 8, 2, 32>}, {transform_indices = @transform_1, window_bounds = array<i64: 2, 32>}, {transform_indices = @transform_2, window_bounds = array<i64: 8, 2, 1>}, {pipeline_mode = #tpu.pipeline_mode<synchronous>, transform_indices = @transform_3, window_bounds = array<i64: 32, 32>}, {pipeline_mode = #tpu.pipeline_mode<synchronous>, transform_indices = @transform_4, window_bounds = array<i64: 1, 32>}, {transform_indices = @transform_5, window_bounds = array<i64: 2, 32>}]} {
    %c0_i32 = arith.constant 0 : i32
    %0 = arith.cmpi eq, %arg1, %c0_i32 : i32
    %1 = arith.extui %0 : i1 to i32
    %c0_i32_0 = arith.constant 0 : i32
    %2 = arith.cmpi ne, %1, %c0_i32_0 : i32
    scf.if %2 {
      %cst_32 = arith.constant -1.000000e+10 : f32
      %50 = vector.broadcast %cst_32 : f32 to vector<2x1xf32>
      %c0_33 = arith.constant 0 : index
      %c0_34 = arith.constant 0 : index
      %51 = vector.load %arg8[%c0_33, %c0_34] : memref<2x1xf32, #tpu.memory_space<vmem>>, vector<2x1xf32>
      tpu.vector_store %arg8[%c0_33, %c0_34], %50 {strides = array<i32>} : memref<2x1xf32, #tpu.memory_space<vmem>>, vector<2x1xf32>,
      %cst_35 = arith.constant 0.000000e+00 : f32
      %52 = vector.broadcast %cst_35 : f32 to vector<2x1xf32>
      %c0_36 = arith.constant 0 : index
      %c0_37 = arith.constant 0 : index
      %53 = vector.load %arg9[%c0_36, %c0_37] : memref<2x1xf32, #tpu.memory_space<vmem>>, vector<2x1xf32>
      tpu.vector_store %arg9[%c0_36, %c0_37], %52 {strides = array<i32>} : memref<2x1xf32, #tpu.memory_space<vmem>>, vector<2x1xf32>,
      %cst_38 = arith.constant 0.000000e+00 : f32
      %54 = vector.broadcast %cst_38 : f32 to vector<2x32xf32>
      %c0_39 = arith.constant 0 : index
      %c0_40 = arith.constant 0 : index
      %55 = vector.load %arg10[%c0_39, %c0_40] : memref<2x32xf32, #tpu.memory_space<vmem>>, vector<2x32xf32>
      tpu.vector_store %arg10[%c0_39, %c0_40], %54 {strides = array<i32>} : memref<2x32xf32, #tpu.memory_space<vmem>>, vector<2x32xf32>,
    } else {
    }
    %c0 = arith.constant 0 : index
    %c0_1 = arith.constant 0 : index
    %c0_2 = arith.constant 0 : index
    %3 = vector.load %arg2[%c0, %c0_1, %c0_2] : memref<8x2x32xf32, #tpu.memory_space<vmem>>, vector<8x2x32xf32>
    %4 = vector.shape_cast %3 : vector<8x2x32xf32> to vector<16x32xf32>
    %c0_3 = arith.constant 0 : index
    %c0_4 = arith.constant 0 : index
    %5 = vector.load %arg5[%c0_3, %c0_4] : memref<32x32xf32, #tpu.memory_space<vmem>>, vector<32x32xf32>
    %cst = arith.constant dense<0.000000e+00> : vector<16x32xf32>
    %6 = tpu.matmul %4, %5, %cst {dimension_numbers = #tpu.dot_dimension_numbers<[1], [0], [0], [1], [0, 0, 1, 1], [], []>} : vector<16x32xf32>, vector<32x32xf32>, vector<16x32xf32> -> vector<16x32xf32>
    %7 = vector.shape_cast %6 : vector<16x32xf32> to vector<8x2x32xf32>
    %c0_5 = arith.constant 0 : index
    %c0_6 = arith.constant 0 : index
    %8 = vector.load %arg3[%c0_5, %c0_6] : memref<2x32xf32, #tpu.memory_space<vmem>>, vector<2x32xf32>
    %9 = vector.shape_cast %8 : vector<2x32xf32> to vector<1x2x32xf32>
    %10 = vector.broadcast %9 : vector<1x2x32xf32> to vector<8x2x32xf32>
    %11 = arith.addf %7, %10 : vector<8x2x32xf32>
    %12 = math.tanh %11 : vector<8x2x32xf32>
    %c0_7 = arith.constant 0 : index
    %c0_8 = arith.constant 0 : index
    %13 = vector.load %arg6[%c0_7, %c0_8] : memref<1x32xf32, #tpu.memory_space<vmem>>, vector<1x32xf32>
    %14 = vector.shape_cast %13 : vector<1x32xf32> to vector<1x1x32xf32>
    %15 = vector.broadcast %14 : vector<1x1x32xf32> to vector<8x2x32xf32>
    %16 = arith.mulf %15, %12 : vector<8x2x32xf32>
    %cst_9 = arith.constant dense<0.000000e+00> : vector<8x2xf32>
    %17 = vector.multi_reduction <add>, %16, %cst_9 [2] : vector<8x2x32xf32> to vector<8x2xf32>
    %18 = vector.shape_cast %17 : vector<8x2xf32> to vector<8x2x1xf32>
    %c0_10 = arith.constant 0 : index
    %c0_11 = arith.constant 0 : index
    %c0_12 = arith.constant 0 : index
    %19 = vector.load %arg4[%c0_10, %c0_11, %c0_12] : memref<8x2x1xf32, #tpu.memory_space<vmem>>, vector<8x2x1xf32>
    %cst_13 = arith.constant 0.000000e+00 : f32
    %20 = vector.broadcast %cst_13 : f32 to vector<8x2x1xf32>
    %21 = arith.cmpf ogt, %19, %20 : vector<8x2x1xf32>
    %cst_14 = arith.constant -1.000000e+10 : f32
    %22 = vector.broadcast %cst_14 : f32 to vector<8x2x1xf32>
    %23 = arith.select %21, %18, %22 : vector<8x2x1xi1>, vector<8x2x1xf32>
    %c0_15 = arith.constant 0 : index
    %c0_16 = arith.constant 0 : index
    %24 = vector.load %arg8[%c0_15, %c0_16] : memref<2x1xf32, #tpu.memory_space<vmem>>, vector<2x1xf32>
    %cst_17 = arith.constant dense<0xFF800000> : vector<2x1xf32>
    %25 = vector.multi_reduction <maximumf>, %23, %cst_17 [0] : vector<8x2x1xf32> to vector<2x1xf32>
    %26 = arith.maximumf %24, %25 : vector<2x1xf32>
    %27 = arith.subf %24, %26 : vector<2x1xf32>
    %28 = math.exp %27 : vector<2x1xf32>
    %29 = vector.shape_cast %26 : vector<2x1xf32> to vector<1x2x1xf32>
    %30 = vector.broadcast %29 : vector<1x2x1xf32> to vector<8x2x1xf32>
    %31 = arith.subf %23, %30 : vector<8x2x1xf32>
    %32 = math.exp %31 : vector<8x2x1xf32>
    %c0_18 = arith.constant 0 : index
    %c0_19 = arith.constant 0 : index
    %33 = vector.load %arg9[%c0_18, %c0_19] : memref<2x1xf32, #tpu.memory_space<vmem>>, vector<2x1xf32>
    %34 = arith.mulf %28, %33 : vector<2x1xf32>
    %cst_20 = arith.constant dense<0.000000e+00> : vector<2x1xf32>
    %35 = vector.multi_reduction <add>, %32, %cst_20 [0] : vector<8x2x1xf32> to vector<2x1xf32>
    %36 = arith.addf %34, %35 : vector<2x1xf32>
    %c0_21 = arith.constant 0 : index
    %c0_22 = arith.constant 0 : index
    %37 = vector.load %arg9[%c0_21, %c0_22] : memref<2x1xf32, #tpu.memory_space<vmem>>, vector<2x1xf32>
    tpu.vector_store %arg9[%c0_21, %c0_22], %36 {strides = array<i32>} : memref<2x1xf32, #tpu.memory_space<vmem>>, vector<2x1xf32>,
    %c0_23 = arith.constant 0 : index
    %c0_24 = arith.constant 0 : index
    %38 = vector.load %arg10[%c0_23, %c0_24] : memref<2x32xf32, #tpu.memory_space<vmem>>, vector<2x32xf32>
    %39 = vector.broadcast %28 : vector<2x1xf32> to vector<2x32xf32>
    %40 = arith.mulf %39, %38 : vector<2x32xf32>
    %41 = vector.broadcast %32 : vector<8x2x1xf32> to vector<8x2x32xf32>
    %42 = arith.mulf %41, %3 : vector<8x2x32xf32>
    %cst_25 = arith.constant dense<0.000000e+00> : vector<2x32xf32>
    %43 = vector.multi_reduction <add>, %42, %cst_25 [0] : vector<8x2x32xf32> to vector<2x32xf32>
    %44 = arith.addf %40, %43 : vector<2x32xf32>
    %c0_26 = arith.constant 0 : index
    %c0_27 = arith.constant 0 : index
    %45 = vector.load %arg10[%c0_26, %c0_27] : memref<2x32xf32, #tpu.memory_space<vmem>>, vector<2x32xf32>
    tpu.vector_store %arg10[%c0_26, %c0_27], %44 {strides = array<i32>} : memref<2x32xf32, #tpu.memory_space<vmem>>, vector<2x32xf32>,
    %c0_28 = arith.constant 0 : index
    %c0_29 = arith.constant 0 : index
    %46 = vector.load %arg8[%c0_28, %c0_29] : memref<2x1xf32, #tpu.memory_space<vmem>>, vector<2x1xf32>
    tpu.vector_store %arg8[%c0_28, %c0_29], %26 {strides = array<i32>} : memref<2x1xf32, #tpu.memory_space<vmem>>, vector<2x1xf32>,
    %c0_i32_30 = arith.constant 0 : i32
    %47 = arith.cmpi eq, %arg1, %c0_i32_30 : i32
    %48 = arith.extui %47 : i1 to i32
    %c0_i32_31 = arith.constant 0 : i32
    %49 = arith.cmpi ne, %48, %c0_i32_31 : i32
    scf.if %49 {
      %c0_32 = arith.constant 0 : index
      %c0_33 = arith.constant 0 : index
      %50 = vector.load %arg10[%c0_32, %c0_33] : memref<2x32xf32, #tpu.memory_space<vmem>>, vector<2x32xf32>
      %c0_34 = arith.constant 0 : index
      %c0_35 = arith.constant 0 : index
      %51 = vector.load %arg9[%c0_34, %c0_35] : memref<2x1xf32, #tpu.memory_space<vmem>>, vector<2x1xf32>
      %52 = tpu.reciprocal %51 : vector<2x1xf32> -> vector<2x1xf32>
      %53 = vector.broadcast %52 : vector<2x1xf32> to vector<2x32xf32>
      %54 = arith.mulf %50, %53 : vector<2x32xf32>
      %c0_36 = arith.constant 0 : index
      %c0_37 = arith.constant 0 : index
      %55 = vector.load %arg7[%c0_36, %c0_37] : memref<2x32xf32, #tpu.memory_space<vmem>>, vector<2x32xf32>
      tpu.vector_store %arg7[%c0_36, %c0_37], %54 {strides = array<i32>} : memref<2x32xf32, #tpu.memory_space<vmem>>, vector<2x32xf32>,
    } else {
    }
    return
  }
  func.func @transform_0(%arg0: i32, %arg1: i32) -> (i32, i32, i32) {
    %c0_i32 = arith.constant 0 : i32
    %c0_i32_0 = arith.constant 0 : i32
    return %arg1, %arg0, %c0_i32 : i32, i32, i32
  }
  func.func @transform_1(%arg0: i32, %arg1: i32) -> (i32, i32) {
    %c0_i32 = arith.constant 0 : i32
    %c0_i32_0 = arith.constant 0 : i32
    return %arg0, %c0_i32 : i32, i32
  }
  func.func @transform_2(%arg0: i32, %arg1: i32) -> (i32, i32, i32) {
    %c0_i32 = arith.constant 0 : i32
    %c0_i32_0 = arith.constant 0 : i32
    return %arg1, %arg0, %c0_i32 : i32, i32, i32
  }
  func.func @transform_3(%arg0: i32, %arg1: i32) -> (i32, i32) {
    %c0_i32 = arith.constant 0 : i32
    %c0_i32_0 = arith.constant 0 : i32
    %c0_i32_1 = arith.constant 0 : i32
    return %c0_i32, %c0_i32_0 : i32, i32
  }
  func.func @transform_4(%arg0: i32, %arg1: i32) -> (i32, i32) {
    %c0_i32 = arith.constant 0 : i32
    %c0_i32_0 = arith.constant 0 : i32
    %c0_i32_1 = arith.constant 0 : i32
    return %c0_i32, %c0_i32_0 : i32, i32
  }
  func.func @transform_5(%arg0: i32, %arg1: i32) -> (i32, i32) {
    %c0_i32 = arith.constant 0 : i32
    %c0_i32_0 = arith.constant 0 : i32
    return %arg0, %c0_i32 : i32, i32
  }
}

</mosaic_0001>

<llo_original>
// kernel: tpu_custom_call.1
$region0: #{tpu_custom_call.1}
  #allocation0 [shape = 'u32[]', space=smem, size = 0x4, offset = 0x4, fixed_abs, tag = 'smem constant byte address 0x4 - core index']
  #allocation1 [shape = 'u32[144,128]{1,0:T(1,128)}', space=vmem, size = 0x12000, scoped, tag = 'internal scratch']
  #allocation2 [shape = 'f32[2,1]{1,0:T(2,128)}', space=vmem, size = 0x400, scoped, tag = 'scratch operand']
  #allocation3 [shape = 'f32[2,1]{1,0:T(2,128)}', space=vmem, size = 0x400, scoped, tag = 'scratch operand']
  #allocation4 [shape = 'f32[2,32]{1,0:T(2,128)}', space=vmem, size = 0x400, scoped, tag = 'scratch operand']
  %s0 = inlined_call_operand.vmem [shape: f32[8,2,32], index: 0, kind: input, shape index: {}]
  %s1 = inlined_call_operand.vmem [shape: f32[2,32], index: 1, kind: input, shape index: {}]
  %s2 = inlined_call_operand.vmem [shape: f32[8,2,1], index: 2, kind: input, shape index: {}]
  %s3 = inlined_call_operand.hbm [shape: f32[32,32], index: 3, kind: input, shape index: {}]
  %s4 = inlined_call_operand.vmem [shape: f32[1,32], index: 4, kind: input, shape index: {}]
  %s5 = inlined_call_operand.hbm [shape: f32[2,32], index: 5, kind: output, shape index: {}]
  %s6 = sld [smem:[#allocation0]]
  $region42: #{tpu_custom_call.1} parent=0
    _
  %s8 = ssub.s32 1, %s6
  %s9 = scalar_select 0, %s8, %s6
  $region1: #{tpu_custom_call.1} parent=0
    #allocation5 [shape = 'u8[16384]{0}', space=vmem, size = 0x4000, scoped, tag = 'input window, operand 3, single buffered']
    #allocation6 [shape = 's32[1]{0}', space=sflag, size = 0x4, scoped, tag = 'scoped memory for tpu_custom_call.1']
    #allocation7 [shape = 's32[1]{0}', space=sflag, size = 0x4, scoped, tag = 'scoped memory for tpu_custom_call.1']
    #allocation8 [shape = 'u8[1024]{0}', space=vmem, size = 0x400, scoped, tag = 'output window, operand 0, single buffered']
    %10 = vsyncpa [#allocation6], 0
    %11 = vsyncpa [#allocation7], 0
    // Predicated region
    $region2: #{tpu_custom_call.1} parent=1 // pred_check
      _
    $region3: #{tpu_custom_call.1} parent=1 // pred_check_branch
      %13 = sbr.rel (0) target = $region5
    $region4: #{tpu_custom_call.1} parent=1 // pred_region
      _
    $region5: #{tpu_custom_call.1} parent=1 // pred_fallthru
      _
    // Predicated region
    $region6: #{tpu_custom_call.1} parent=1 // pred_check
      _
    $region7: #{tpu_custom_call.1} parent=1 // pred_check_branch
      %15 = sbr.rel (0) target = $region9
    $region8: #{tpu_custom_call.1} parent=1 // pred_region
      _
    $region9: #{tpu_custom_call.1} parent=1 // pred_fallthru
      _
    // Predicated region
    $region10: #{tpu_custom_call.1} parent=1 // pred_check
      _
    $region11: #{tpu_custom_call.1} parent=1 // pred_check_branch
      %17 = sbr.rel (0) target = $region13
    $region12: #{tpu_custom_call.1} parent=1 // pred_region
      _
    $region13: #{tpu_custom_call.1} parent=1 // pred_fallthru
      _
    // Predicated region
    $region14: #{tpu_custom_call.1} parent=1 // pred_check
      _
    $region15: #{tpu_custom_call.1} parent=1 // pred_check_branch
      %19 = sbr.rel (0) target = $region17
    $region16: #{tpu_custom_call.1} parent=1 // pred_region
      %s21 = ssub.s32 512, 512
      %22 = vsyncadd [#allocation6], %s21
      %s23 = sshll.u32 [#allocation5], 4
      %s24 = int_to_ptr.vmem [resolvable:$true] %s23
      %29 = dma.hbm_to_vmem [thread:$0]  %s3, 512, %s24, [#allocation6], 128, 128, 8
    $region17: #{tpu_custom_call.1} parent=1 // pred_fallthru
      _
    // Predicated region
    $region18: #{tpu_custom_call.1} parent=1 // pred_check
      _
    $region19: #{tpu_custom_call.1} parent=1 // pred_check_branch
      %31 = sbr.rel (0) target = $region21
    $region20: #{tpu_custom_call.1} parent=1 // pred_region
      _
    $region21: #{tpu_custom_call.1} parent=1 // pred_fallthru
      _
    // Predicated region
    $region22: #{tpu_custom_call.1} parent=1 // pred_check
      _
    $region23: #{tpu_custom_call.1} parent=1 // pred_check_branch
      %33 = sbr.rel (0) target = $region25
    $region24: #{tpu_custom_call.1} parent=1 // pred_region
      %34 = dma.done [#allocation6], 512
    $region25: #{tpu_custom_call.1} parent=1 // pred_fallthru
      _
    %p35 = scmp.eq.s32.totalorder 0, 0
    // Predicated region
    $region26: #{tpu_custom_call.1} parent=1 // pred_check
      %p36 = pneg %p35
    $region27: #{tpu_custom_call.1} parent=1 // pred_check_branch
      %38 = sbr.rel (%p36) target = $region29
    $region28: #{tpu_custom_call.1} parent=1 // pred_region
      %vm39 = vcmask 1024
      %40 = vst.msk [vmem:[#allocation2] sm:$0x3] %vm39, -1e+10
      %41 = vst.msk [vmem:[#allocation3] sm:$0x3] %vm39, 0.0
      %vm42 = vcmask 254976
      %43 = vst.msk [vmem:[#allocation4] sm:$0x3] %vm42, 0.0
    $region29: #{tpu_custom_call.1} parent=1 // pred_fallthru
      _
    %v44 = vld [vmem:[%s0] sm:$0x3]
    %v45 = vld [vmem:[%s0 + $0x2] sm:$0x3]
    %v46 = vld [vmem:[%s0 + $0x4] sm:$0x3]
    %v47 = vld [vmem:[%s0 + $0x6] sm:$0x3]
    %v48 = vld [vmem:[%s0 + $0x8] sm:$0x3]
    %v49 = vld [vmem:[%s0 + $0xa] sm:$0x3]
    %v50 = vld [vmem:[%s0 + $0xc] sm:$0x3]
    %v51 = vld [vmem:[%s0 + $0xe] sm:$0x3]
    %v52 = vld [vmem:[#allocation5] sm:$0xff]
    %v53 = vld [vmem:[#allocation5 + $0x8] sm:$0xff]
    %v54 = vld [vmem:[#allocation5 + $0x10] sm:$0xff]
    %v55 = vld [vmem:[#allocation5 + $0x18] sm:$0xff]
    %v64 = vcombine.low %v44, %v45
    %v65 = vcombine.low %v46, %v47
    %v67 = vunpack.c.l.s4 1983009808
    %v68 = vunpack.c.0.s8 %v67
    %v69 = vlaneseq
    %v70 = vshrl.u32 %v69, 7
    %v71 = vsub.s32 %v68, %v70
    %v72 = vrot.slane %v64, %v71
    %v74 = vunpack.c.l.s4 1983009808
    %v75 = vunpack.c.0.s8 %v74
    %v76 = vlaneseq
    %v77 = vshrl.u32 %v76, 7
    %v78 = vsub.s32 %v75, %v77
    %v79 = vrot.slane %v65, %v78
    %v80 = vcombine.low %v72, %v79
    %v81 = vcombine.low %v48, %v49
    %v82 = vcombine.low %v50, %v51
    %v84 = vunpack.c.l.s4 1983009808
    %v85 = vunpack.c.0.s8 %v84
    %v86 = vlaneseq
    %v87 = vshrl.u32 %v86, 7
    %v88 = vsub.s32 %v85, %v87
    %v89 = vrot.slane %v81, %v88
    %v91 = vunpack.c.l.s4 1983009808
    %v92 = vunpack.c.0.s8 %v91
    %v93 = vlaneseq
    %v94 = vshrl.u32 %v93, 7
    %v95 = vsub.s32 %v92, %v94
    %v96 = vrot.slane %v82, %v95
    %v97 = vcombine.low %v89, %v96
    %vm98 = vcmask 261120
    %v99 = vsel %vm98, %v80, 0
    %v101 = vsel %vm98, %v97, 0
    %103 = vmatprep.subr.mxu0 0.0
    %104 = vmatpush1.msra.mxu0 %v52
    %105 = vmatprep.subr.mxu0 0.0
    %106 = vmatpush1.msra.mxu0 %v53
    %107 = vmatprep.subr.mxu0 0.0
    %108 = vmatpush1.msra.mxu0 %v54
    %109 = vmatprep.subr.mxu0 0.0
    %110 = vmatpush1.msra.mxu0 %v55
    %111 = vmatprep.subr.mxu0 0.0
    %112 = vmatpush1.msra.mxu0 0.0
    %113 = vmatprep.subr.mxu0 0.0
    %114 = vmatpush1.msra.mxu0 0.0
    %115 = vmatprep.subr.mxu0 0.0
    %116 = vmatpush1.msra.mxu0 0.0
    %117 = vmatprep.subr.mxu0 0.0
    %118 = vmatpush1.msra.mxu0 0.0
    %119 = vmatprep.subr.mxu0 0.0
    %120 = vmatpush1.msra.mxu0 0.0
    %121 = vmatprep.subr.mxu0 0.0
    %122 = vmatpush1.msra.mxu0 0.0
    %123 = vmatprep.subr.mxu0 0.0
    %124 = vmatpush1.msra.mxu0 0.0
    %125 = vmatprep.subr.mxu0 0.0
    %126 = vmatpush1.msra.mxu0 0.0
    %127 = vmatprep.subr.mxu0 0.0
    %128 = vmatpush1.msra.mxu0 0.0
    %129 = vmatprep.subr.mxu0 0.0
    %130 = vmatpush1.msra.mxu0 0.0
    %131 = vmatprep.subr.mxu0 0.0
    %132 = vmatpush1.msra.mxu0 0.0
    %133 = vmatprep.subr.mxu0 0.0
    %134 = vmatpush1.msra.mxu0 0.0
    %135 = vmatprep.subr.mxu0 0.0
    %136 = vmatpush1.msra.mxu0 0.0
    %137 = vmatprep.subr.mxu0 0.0
    %138 = vmatpush1.msra.mxu0 0.0
    %139 = vmatprep.subr.mxu0 0.0
    %140 = vmatpush1.msra.mxu0 0.0
    %141 = vmatprep.subr.mxu0 0.0
    %142 = vmatpush1.msra.mxu0 0.0
    %143 = vmatprep.subr.mxu0 0.0
    %144 = vmatpush1.msra.mxu0 0.0
    %145 = vmatprep.subr.mxu0 0.0
    %146 = vmatpush1.msra.mxu0 0.0
    %147 = vmatprep.subr.mxu0 0.0
    %148 = vmatpush1.msra.mxu0 0.0
    %149 = vmatprep.subr.mxu0 0.0
    %150 = vmatpush1.msra.mxu0 0.0
    %151 = vmatprep.subr.mxu0 0.0
    %152 = vmatpush1.msra.mxu0 0.0
    %153 = vmatprep.subr.mxu0 0.0
    %154 = vmatpush1.msra.mxu0 0.0
    %155 = vmatprep.subr.mxu0 0.0
    %156 = vmatpush1.msra.mxu0 0.0
    %157 = vmatprep.subr.mxu0 0.0
    %158 = vmatpush1.msra.mxu0 0.0
    %159 = vmatprep.subr.mxu0 0.0
    %160 = vmatpush1.msra.mxu0 0.0
    %161 = vmatprep.subr.mxu0 0.0
    %162 = vmatpush1.msra.mxu0 0.0
    %163 = vmatprep.subr.mxu0 0.0
    %164 = vmatpush1.msra.mxu0 0.0
    %165 = vmatprep.subr.mxu0 0.0
    %166 = vmatpush1.msra.mxu0 0.0
    %167 = vmatprep.mubr.f32.mxu0 0.0
    %168 = vmatmul.mubr.f32.gmra.mrb[0].mxu0 %v99
    %v169 = vpop.f32.mrb[0].mxu0
    %v170 = vadd.f32 0.0, %v169
    %v171 = vpop.f32.mrb[0].mxu0
    %172 = vmatprep.mubr.f32.mxu0 0.0
    %173 = vmatmul.mubr.f32.gmra.mrb[0].mxu0 %v101
    %v174 = vpop.f32.mrb[0].mxu0
    %v175 = vadd.f32 0.0, %v174
    %v176 = vpop.f32.mrb[0].mxu0
    %177 = vdwg.mxu0
    %v180 = vcombine.high %v170, %v170
    %v182 = vunpack.c.l.s4 1983009808
    %v183 = vunpack.c.0.s8 %v182
    %v184 = vlaneseq
    %v185 = vshrl.u32 %v184, 7
    %v186 = vsub.s32 %v183, %v185
    %v187 = vrot.slane %v170, %v186
    %v189 = vunpack.c.l.s4 1983009808
    %v190 = vunpack.c.0.s8 %v189
    %v191 = vlaneseq
    %v192 = vshrl.u32 %v191, 7
    %v193 = vsub.s32 %v190, %v192
    %v194 = vrot.slane %v180, %v193
    %v195 = vcombine.high %v187, %v187
    %v196 = vcombine.high %v194, %v194
    %v197 = vcombine.high %v175, %v175
    %v199 = vunpack.c.l.s4 1983009808
    %v200 = vunpack.c.0.s8 %v199
    %v201 = vlaneseq
    %v202 = vshrl.u32 %v201, 7
    %v203 = vsub.s32 %v200, %v202
    %v204 = vrot.slane %v175, %v203
    %v206 = vunpack.c.l.s4 1983009808
    %v207 = vunpack.c.0.s8 %v206
    %v208 = vlaneseq
    %v209 = vshrl.u32 %v208, 7
    %v210 = vsub.s32 %v207, %v209
    %v211 = vrot.slane %v197, %v210
    %v212 = vcombine.high %v204, %v204
    %v213 = vcombine.high %v211, %v211
    %v222 = vld [vmem:[%s1] sm:$0x3]
    %v223 = vadd.f32 %v187, %v222
    %v224 = vadd.f32 %v195, %v222
    %v225 = vadd.f32 %v194, %v222
    %v226 = vadd.f32 %v196, %v222
    %v227 = vadd.f32 %v204, %v222
    %v228 = vadd.f32 %v212, %v222
    %v229 = vadd.f32 %v211, %v222
    %v230 = vadd.f32 %v213, %v222
    %v231 = vtanh.pop %v223
    %v232 = vtanh.pop %v224
    %v233 = vtanh.pop %v225
    %v234 = vtanh.pop %v226
    %v235 = vtanh.pop %v227
    %v236 = vtanh.pop %v228
    %v237 = vtanh.pop %v229
    %v238 = vtanh.pop %v230
    %v239 = vld [vmem:[%s4] sm:$0x1]
    %v241 = vlaneseq
    %v242 = vshrl.u32 %v241, 7
    %v243 = vsub.s32 0, %v242
    %v244 = vrot.slane %v239, %v243
    %v246 = vmul.f32 %v244, %v231
    %v247 = vmul.f32 %v244, %v232
    %v248 = vmul.f32 %v244, %v233
    %v249 = vmul.f32 %v244, %v234
    %v250 = vmul.f32 %v244, %v235
    %v251 = vmul.f32 %v244, %v236
    %v252 = vmul.f32 %v244, %v237
    %v253 = vmul.f32 %v244, %v238
    %vm254 = vcmask 254976
    %v255 = vsel %vm254, %v246, 0.0
    %256 = vadd.xlane.f32.xlu0 %v255
    %v257 = vpop.xlane.xlu0 %256
    %v258 = vsel %vm254, %v247, 0.0
    %259 = vadd.xlane.f32.xlu0 %v258
    %v260 = vpop.xlane.xlu0 %259
    %v261 = vsel %vm254, %v248, 0.0
    %262 = vadd.xlane.f32.xlu0 %v261
    %v263 = vpop.xlane.xlu0 %262
    %v264 = vsel %vm254, %v249, 0.0
    %265 = vadd.xlane.f32.xlu0 %v264
    %v266 = vpop.xlane.xlu0 %265
    %v267 = vsel %vm254, %v250, 0.0
    %268 = vadd.xlane.f32.xlu0 %v267
    %v269 = vpop.xlane.xlu0 %268
    %v270 = vsel %vm254, %v251, 0.0
    %271 = vadd.xlane.f32.xlu0 %v270
    %v272 = vpop.xlane.xlu0 %271
    %v273 = vsel %vm254, %v252, 0.0
    %274 = vadd.xlane.f32.xlu0 %v273
    %v275 = vpop.xlane.xlu0 %274
    %v276 = vsel %vm254, %v253, 0.0
    %277 = vadd.xlane.f32.xlu0 %v276
    %v278 = vpop.xlane.xlu0 %277
    %v279 = vld [vmem:[%s2] sm:$0x3]
    %v280 = vld [vmem:[%s2 + $0x2] sm:$0x3]
    %v281 = vld [vmem:[%s2 + $0x4] sm:$0x3]
    %v282 = vld [vmem:[%s2 + $0x6] sm:$0x3]
    %v283 = vld [vmem:[%s2 + $0x8] sm:$0x3]
    %v284 = vld [vmem:[%s2 + $0xa] sm:$0x3]
    %v285 = vld [vmem:[%s2 + $0xc] sm:$0x3]
    %v286 = vld [vmem:[%s2 + $0xe] sm:$0x3]
    %vm287 = vcmp.gt.f32.partialorder %v279, 0.0
    %vm288 = vcmp.gt.f32.partialorder %v280, 0.0
    %vm289 = vcmp.gt.f32.partialorder %v281, 0.0
    %vm290 = vcmp.gt.f32.partialorder %v282, 0.0
    %vm291 = vcmp.gt.f32.partialorder %v283, 0.0
    %vm292 = vcmp.gt.f32.partialorder %v284, 0.0
    %vm293 = vcmp.gt.f32.partialorder %v285, 0.0
    %vm294 = vcmp.gt.f32.partialorder %v286, 0.0
    %v295 = vsel %vm287, %v257, -1e+10
    %v296 = vsel %vm288, %v260, -1e+10
    %v297 = vsel %vm289, %v263, -1e+10
    %v298 = vsel %vm290, %v266, -1e+10
    %v299 = vsel %vm291, %v269, -1e+10
    %v300 = vsel %vm292, %v272, -1e+10
    %v301 = vsel %vm293, %v275, -1e+10
    %v302 = vsel %vm294, %v278, -1e+10
    %v303 = vld [vmem:[#allocation2] sm:$0x3]
    %vm304 = vcmask 1024
    %v305 = vsel %vm304, %v295, -inf
    %v306 = vsel %vm304, %v296, -inf
    %v307 = vsel %vm304, %v297, -inf
    %v308 = vsel %vm304, %v298, -inf
    %v309 = vsel %vm304, %v299, -inf
    %v310 = vmax.f32 %v305, %v309
    %v311 = vsel %vm304, %v300, -inf
    %v312 = vmax.f32 %v306, %v311
    %v313 = vsel %vm304, %v301, -inf
    %v314 = vmax.f32 %v307, %v313
    %v315 = vsel %vm304, %v302, -inf
    %v316 = vmax.f32 %v308, %v315
    %v317 = vmax.f32 %v310, %v312
    %v318 = vmax.f32 %v314, %v316
    %v319 = vmax.f32 %v317, %v318
    %v320 = vmax.f32 %v303, %v319
    %v321 = vsub.f32 %v303, %v320
    %v322 = vmul.f32 %v321, 1.442695
    %v323 = vpow.pop %v322
    %v324 = vsub.f32 %v295, %v320
    %v325 = vsub.f32 %v296, %v320
    %v326 = vsub.f32 %v297, %v320
    %v327 = vsub.f32 %v298, %v320
    %v328 = vsub.f32 %v299, %v320
    %v329 = vsub.f32 %v300, %v320
    %v330 = vsub.f32 %v301, %v320
    %v331 = vsub.f32 %v302, %v320
    %v332 = vmul.f32 %v324, 1.442695
    %v333 = vpow.pop %v332
    %v334 = vmul.f32 %v325, 1.442695
    %v335 = vpow.pop %v334
    %v336 = vmul.f32 %v326, 1.442695
    %v337 = vpow.pop %v336
    %v338 = vmul.f32 %v327, 1.442695
    %v339 = vpow.pop %v338
    %v340 = vmul.f32 %v328, 1.442695
    %v341 = vpow.pop %v340
    %v342 = vmul.f32 %v329, 1.442695
    %v343 = vpow.pop %v342
    %v344 = vmul.f32 %v330, 1.442695
    %v345 = vpow.pop %v344
    %v346 = vmul.f32 %v331, 1.442695
    %v347 = vpow.pop %v346
    %v348 = vld [vmem:[#allocation3] sm:$0x3]
    %v349 = vmul.f32 %v323, %v348
    %v350 = vsel %vm304, %v333, 0.0
    %v351 = vsel %vm304, %v335, 0.0
    %v352 = vadd.f32 %v350, %v351
    %v353 = vsel %vm304, %v337, 0.0
    %v354 = vadd.f32 %v352, %v353
    %v355 = vsel %vm304, %v339, 0.0
    %v356 = vadd.f32 %v354, %v355
    %v357 = vsel %vm304, %v341, 0.0
    %v358 = vadd.f32 %v356, %v357
    %v359 = vsel %vm304, %v343, 0.0
    %v360 = vadd.f32 %v358, %v359
    %v361 = vsel %vm304, %v345, 0.0
    %v362 = vadd.f32 %v360, %v361
    %v363 = vsel %vm304, %v347, 0.0
    %v364 = vadd.f32 %v362, %v363
    %v365 = vadd.f32 %v349, %v364
    %366 = vst.msk [vmem:[#allocation3] sm:$0x3] %vm304, %v365
    %v367 = vld [vmem:[#allocation4] sm:$0x3]
    %369 = vset.pattern.permute.xlu0 0
    %370 = vperm.xlu0 %369, %v323
    %v371 = vpop.permute.xlu0 %370
    %v373 = vmul.f32 %v371, %v367
    %375 = vset.pattern.permute.xlu0 0
    %376 = vperm.xlu0 %375, %v333
    %v377 = vpop.permute.xlu0 %376
    %380 = vset.pattern.permute.xlu0 0
    %381 = vperm.xlu0 %380, %v335
    %v382 = vpop.permute.xlu0 %381
    %385 = vset.pattern.permute.xlu0 0
    %386 = vperm.xlu0 %385, %v337
    %v387 = vpop.permute.xlu0 %386
    %390 = vset.pattern.permute.xlu0 0
    %391 = vperm.xlu0 %390, %v339
    %v392 = vpop.permute.xlu0 %391
    %395 = vset.pattern.permute.xlu0 0
    %396 = vperm.xlu0 %395, %v341
    %v397 = vpop.permute.xlu0 %396
    %400 = vset.pattern.permute.xlu0 0
    %401 = vperm.xlu0 %400, %v343
    %v402 = vpop.permute.xlu0 %401
    %405 = vset.pattern.permute.xlu0 0
    %406 = vperm.xlu0 %405, %v345
    %v407 = vpop.permute.xlu0 %406
    %410 = vset.pattern.permute.xlu0 0
    %411 = vperm.xlu0 %410, %v347
    %v412 = vpop.permute.xlu0 %411
    %v414 = vmul.f32 %v377, %v44
    %v415 = vmul.f32 %v382, %v45
    %v416 = vmul.f32 %v387, %v46
    %v417 = vmul.f32 %v392, %v47
    %v418 = vmul.f32 %v397, %v48
    %v419 = vmul.f32 %v402, %v49
    %v420 = vmul.f32 %v407, %v50
    %v421 = vmul.f32 %v412, %v51
    %v422 = vsel %vm254, %v414, 0.0
    %v423 = vsel %vm254, %v415, 0.0
    %v424 = vadd.f32 %v422, %v423
    %v425 = vsel %vm254, %v416, 0.0
    %v426 = vadd.f32 %v424, %v425
    %v427 = vsel %vm254, %v417, 0.0
    %v428 = vadd.f32 %v426, %v427
    %v429 = vsel %vm254, %v418, 0.0
    %v430 = vadd.f32 %v428, %v429
    %v431 = vsel %vm254, %v419, 0.0
    %v432 = vadd.f32 %v430, %v431
    %v433 = vsel %vm254, %v420, 0.0
    %v434 = vadd.f32 %v432, %v433
    %v435 = vsel %vm254, %v421, 0.0
    %v436 = vadd.f32 %v434, %v435
    %v437 = vadd.f32 %v373, %v436
    %438 = vst.msk [vmem:[#allocation4] sm:$0x3] %vm254, %v437
    %439 = vst.msk [vmem:[#allocation2] sm:$0x3] %vm304, %v320
    // Predicated region
    $region30: #{tpu_custom_call.1} parent=1 // pred_check
      %p440 = pneg %p35
    $region31: #{tpu_custom_call.1} parent=1 // pred_check_branch
      %442 = sbr.rel (%p440) target = $region33
    $region32: #{tpu_custom_call.1} parent=1 // pred_region
      %v443 = vld [vmem:[#allocation4] sm:$0x3]
      %v444 = vld [vmem:[#allocation3] sm:$0x3]
      %v445 = vrcp.pop %v444
      %447 = vset.pattern.permute.xlu0 0
      %448 = vperm.xlu0 %447, %v445
      %v449 = vpop.permute.xlu0 %448
      %v451 = vmul.f32 %v443, %v449
      %452 = vst.msk [vmem:[#allocation8] sm:$0x3] %vm254, %v451
    $region33: #{tpu_custom_call.1} parent=1 // pred_fallthru
      _
    // Predicated region
    $region34: #{tpu_custom_call.1} parent=1 // pred_check
      _
    $region35: #{tpu_custom_call.1} parent=1 // pred_check_branch
      %454 = sbr.rel (0) target = $region37
    $region36: #{tpu_custom_call.1} parent=1 // pred_region
      %s456 = ssub.s32 32, 32
      %457 = vsyncadd [#allocation7], %s456
      %s459 = sshll.u32 [#allocation8], 4
      %s460 = int_to_ptr.vmem [resolvable:$true] %s459
      %462 = dma.vmem_to_hbm [thread:$0]  %s460, 32, %s5, [#allocation7]
    $region37: #{tpu_custom_call.1} parent=1 // pred_fallthru
      _
    // Predicated region
    $region38: #{tpu_custom_call.1} parent=1 // pred_check
      _
    $region39: #{tpu_custom_call.1} parent=1 // pred_check_branch
      %464 = sbr.rel (0) target = $region41
    $region40: #{tpu_custom_call.1} parent=1 // pred_region
      %465 = dma.done [#allocation7], 32
    $region41: #{tpu_custom_call.1} parent=1 // pred_fallthru
      _
    %466 = vsyncpa [#allocation6], 1
    %467 = vsyncpa [#allocation7], 1

</llo_original>
